<compile_context>
chip_gen: v6e
topology: v6e:2x2x1
jax: 0.10.0
libtpu: 0.0.40
codegen_flags: <defaults>
</compile_context>

<pallas_src>
import functools

import jax
import jax.numpy as jnp
from jax import lax
from jax.experimental import pallas as pl
from jax.experimental.pallas import tpu as pltpu


_COMPILER_PARAMS = pltpu.CompilerParams(
    dimension_semantics=("parallel", "parallel"),
    vmem_limit_bytes=48 * 1024 * 1024,
)


# ------------------------------ Pallas kernels -------------------------------

def _lateral_kernel(x_ref, w_ref, b_ref, o_ref):
    """1x1 conv straight from NCHW: x (Cin, TL) f32, w (Cin, Cout) bf16 -> o (TL, Cout).

    Contracting dim 0 folds the NCHW->NHWC layout change into the matmul (no
    separate transpose pass); bf16 operands, f32 accumulation on the MXU.
    """
    acc = lax.dot_general(
        x_ref[...].astype(jnp.bfloat16), w_ref[...],
        dimension_numbers=(((0,), (0,)), ((), ())),
        preferred_element_type=jnp.float32)
    o_ref[...] = (acc + b_ref[...]).astype(o_ref.dtype)


def _conv_taps_matmul(m_top, m_main, m_bot, w_ref, b_ref, o_ref, *, W, acc_per_dy):
    """3x3 conv of TH rows flattened to (R = TH*W, C).

    m_top / m_bot are the (W, C) halo rows (already merged + zero-masked), m_main is
    the (R, C) block of rows being convolved.  The output is channel-major
    (Cout, R), so the kernel writes NCHW directly with a lane-dense spatial axis.
    """
    R, C = m_main.shape
    Cout = w_ref.shape[0]
    w_col = lax.broadcasted_iota(jnp.int32, (R, 1), 0) % W
    at_w0 = w_col == 0
    at_w1 = w_col == W - 1
    zero_row = jnp.zeros((1, C), jnp.float32)

    # dy = -1 / 0 / +1 row-shifted views (H zero padding arrives via masked halos).
    rows = (jnp.concatenate([m_top, m_main[:R - W]], axis=0),
            m_main,
            jnp.concatenate([m_main[W:], m_bot], axis=0))

    def dx_taps(r):
        # TODO(synk): pltpu.roll on the sublane axis would move these shifts to the XLU.
        left = jnp.where(at_w0, 0.0, jnp.concatenate([zero_row, r[:-1]], axis=0))
        right = jnp.where(at_w1, 0.0, jnp.concatenate([r[1:], zero_row], axis=0))
        return jnp.concatenate([left, r, right], axis=1)          # (R, 3C)

    dims = (((1,), (1,)), ((), ()))                                # A @ B^T
    if acc_per_dy:
        # Large C: three accumulating K=3C matmuls (no 9C-wide lane concat in VMEM).
        acc = jnp.zeros((Cout, R), jnp.float32)
        for dy in range(3):
            taps = dx_taps(rows[dy]).astype(jnp.bfloat16)
            acc = acc + lax.dot_general(
                w_ref[:, dy * 3 * C:(dy + 1) * 3 * C], taps,
                dims, preferred_element_type=jnp.float32)
    else:
        taps = jnp.concatenate([dx_taps(r) for r in rows], axis=1).astype(jnp.bfloat16)
        acc = lax.dot_general(w_ref[...], taps, dims,
                              preferred_element_type=jnp.float32)
    o_ref[...] = (acc + b_ref[...]).astype(o_ref.dtype)


def _halo_masks(t):
    """1.0 / 0.0 validity of the top / bottom halo rows (H zero padding)."""
    tv = jnp.where(t > 0, 1.0, 0.0).astype(jnp.float32)
    bv = jnp.where(t < pl.num_programs(1) - 1, 1.0, 0.0).astype(jnp.float32)
    return tv, bv


def _pconv_kernel(ftop_ref, fmain_ref, fbot_ref, w_ref, b_ref, o_ref, *, acc_per_dy):
    """3x3 conv (pad=1) of TH output rows; halo rows arrive via clamped index_maps."""
    W = ftop_ref.shape[0]
    tv, bv = _halo_masks(pl.program_id(1))
    m_top = ftop_ref[...].astype(jnp.float32) * tv
    m_main = fmain_ref[...].astype(jnp.float32)
    m_bot = fbot_ref[...].astype(jnp.float32) * bv
    _conv_taps_matmul(m_top, m_main, m_bot, w_ref, b_ref, o_ref,
                      W=W, acc_per_dy=acc_per_dy)


def _merge_pconv_kernel(ftop_ref, fmain_ref, fbot_ref, ctop_ref, cmain_ref, cbot_ref,
                        w_ref, b_ref, *o_refs, acc_per_dy, write_merged):
    """Fused (2x nearest upsample of coarse lateral + add + 3x3 conv) for TH rows."""
    W = ftop_ref.shape[0]
    R, C = fmain_ref.shape
    f32 = jnp.float32
    tv, bv = _halo_masks(pl.program_id(1))
    up_top = jnp.repeat(ctop_ref[...].astype(f32), 2, axis=0)              # (W, C)
    up_bot = jnp.repeat(cbot_ref[...].astype(f32), 2, axis=0)              # (W, C)
    up_main = jnp.repeat(jnp.repeat(cmain_ref[...].astype(f32), 2, axis=0), 2, axis=1)
    up_main = up_main.reshape(R, C)                                        # (TH*W, C)
    m_top = (ftop_ref[...].astype(f32) + up_top) * tv
    m_main = fmain_ref[...].astype(f32) + up_main
    m_bot = (fbot_ref[...].astype(f32) + up_bot) * bv
    if write_merged:
        # merged lateral rows (always-valid centre rows) -- needed by the level below
        o_refs[1][...] = m_main.astype(o_refs[1].dtype)
    _conv_taps_matmul(m_top, m_main, m_bot, w_ref, b_ref, o_refs[0],
                      W=W, acc_per_dy=acc_per_dy)


# ------------------------------ Pallas wrappers -------------------------------

def lateral_conv1x1(x_nchw, w, b, *, tile_l=2048):
    """1x1 lateral conv, NCHW f32 input -> NHWC bf16 output."""
    assert tile_l % 128 == 0
    N, Cin, H, W = x_nchw.shape
    Cout = w.shape[1]
    L = H * W
    x3 = x_nchw.reshape(N, Cin, L)              # free reshape of contiguous NCHW
    TL = L if L <= tile_l else tile_l
    grid = (N, pl.cdiv(L, TL))
    cost = pl.CostEstimate(
        flops=2 * N * L * Cin * Cout, transcendentals=0,
        bytes_accessed=4 * N * L * Cin + 2 * Cin * Cout + 4 * Cout + 2 * N * L * Cout)
    out = pl.pallas_call(
        _lateral_kernel,
        out_shape=jax.ShapeDtypeStruct((N, L, Cout), jnp.bfloat16),
        grid=grid,
        in_specs=[
            pl.BlockSpec((None, Cin, TL), lambda n, l: (n, 0, l)),
            pl.BlockSpec((Cin, Cout), lambda n, l: (0, 0)),   # weights: VMEM resident
            pl.BlockSpec((1, Cout), lambda n, l: (0, 0)),     # bias:    VMEM resident
        ],
        out_specs=pl.BlockSpec((None, TL, Cout), lambda n, l: (n, l, 0)),
        compiler_params=_COMPILER_PARAMS,
        cost_estimate=cost,
    )(x3, w.astype(jnp.bfloat16), b.reshape(1, Cout).astype(jnp.float32))
    return out.reshape(N, H, W, Cout)


def _pick_th(H, W, C, *, need_even, block_bytes=4 << 20, max_th=64):
    """Output rows per grid step: the whole map when it is small, otherwise the
    largest divisor of H whose block keeps the lane constraints and VMEM budget."""
    if H * W * C * 4 <= block_bytes:
        return H
    best = None
    step = 2 if need_even else 1
    for th in range(step, min(H, max_th) + 1, step):
        if H % th or (th * W) % 128 or th * W * C * 4 > block_bytes:
            continue
        best = th
    # TODO(synk): very large maps with awkward W fall back to the whole-map block.
    return best if best is not None else H


def _fine_row_spec(H, W, C, TH, off):
    def imap(n, t, off=off):
        r = jnp.minimum(jnp.maximum(t * TH + off, 0), H - 1)
        return (n, r, 0, 0)
    return pl.BlockSpec((None, None, W, C), imap)


def _coarse_row_spec(H, Wc, C, TH, off):
    def imap(n, t, off=off):
        r = jnp.minimum(jnp.maximum(t * TH + off, 0), H - 1)
        return (n, r // 2, 0, 0)                   # nearest-2x: coarse row = fine row // 2
    return pl.BlockSpec((None, None, Wc, C), imap)


def pconv3x3(fine, w3, b, coarse=None, return_merged=False):
    """3x3 conv (stride 1, pad 1) over `fine` (NHWC), optionally fused with the 2x
    top-down merge `fine + nearest_upsample_2x(coarse)`.

    Grid = (N, H // TH): TH output rows per step.  Halos come from two clamped
    1-row index_maps (no padded copy in HBM), taps are built in-register and
    contracted on the MXU with bf16 operands / f32 accumulation, and the result is
    written channel-major so the kernel emits NCHW directly.

    Returns (conv_out NCHW f32, merged NHWC or None).
    """
    N, H, W, C = fine.shape
    Cout = w3.shape[-1]
    fused = coarse is not None
    assert fused or not return_merged
    w_t = jnp.transpose(w3.reshape(9 * C, Cout)).astype(jnp.bfloat16)   # (Cout, 9C)
    bias = b.reshape(Cout, 1).astype(jnp.float32)
    acc_per_dy = C >= 128
    TH = _pick_th(H, W, C, need_even=fused)
    grid = (N, H // TH)
    fine3 = fine.reshape(N, H * W, C)            # free view for the flattened main block

    in_specs = [
        _fine_row_spec(H, W, C, TH, -1),                                  # top halo row
        pl.BlockSpec((None, TH * W, C), lambda n, t: (n, t, 0)),          # TH main rows
        _fine_row_spec(H, W, C, TH, TH),                                  # bottom halo row
    ]
    args = [fine, fine3, fine]
    bytes_accessed = (fine.dtype.itemsize * N * H * W * C
                      + 4 * N * H * W * Cout + 2 * 9 * C * Cout + 4 * Cout)

    if fused:
        Hc, Wc = coarse.shape[1], coarse.shape[2]
        assert H == 2 * Hc and W == 2 * Wc and W % 8 == 0 and TH % 2 == 0
        in_specs += [
            _coarse_row_spec(H, Wc, C, TH, -1),
            pl.BlockSpec((None, TH // 2, Wc, C), lambda n, t: (n, t, 0, 0)),
            _coarse_row_spec(H, Wc, C, TH, TH),
        ]
        args += [coarse, coarse, coarse]
        bytes_accessed += coarse.dtype.itemsize * N * Hc * Wc * C
        kernel = functools.partial(_merge_pconv_kernel, acc_per_dy=acc_per_dy,
                                   write_merged=return_merged)
    else:
        kernel = functools.partial(_pconv_kernel, acc_per_dy=acc_per_dy)

    in_specs += [
        pl.BlockSpec((Cout, 9 * C), lambda n, t: (0, 0)),   # weights: VMEM resident
        pl.BlockSpec((Cout, 1), lambda n, t: (0, 0)),       # bias:    VMEM resident
    ]
    args += [w_t, bias]

    out_shape = [jax.ShapeDtypeStruct((N, Cout, H * W), jnp.float32)]
    out_specs = [pl.BlockSpec((None, Cout, TH * W), lambda n, t: (n, 0, t))]
    if return_merged:
        out_shape.append(jax.ShapeDtypeStruct((N, H * W, C), fine.dtype))
        out_specs.append(pl.BlockSpec((None, TH * W, C), lambda n, t: (n, t, 0)))
        bytes_accessed += fine.dtype.itemsize * N * H * W * C

    cost = pl.CostEstimate(flops=2 * N * H * W * 9 * C * Cout, transcendentals=0,
                           bytes_accessed=int(bytes_accessed))
    res = pl.pallas_call(
        kernel,
        out_shape=tuple(out_shape),
        grid=grid,
        in_specs=in_specs,
        out_specs=tuple(out_specs),
        compiler_params=_COMPILER_PARAMS,
        cost_estimate=cost,
    )(*args)
    conv = res[0].reshape(N, Cout, H, W)
    merged = res[1].reshape(N, H, W, C) if return_merged else None
    return conv, merged


# -------------------------------- FPN module ----------------------------------

def init_fpn_params(key, inplanes, outplanes, num_level, downsample):
    """Deterministic synthetic parameter init (shapes match nn.Conv2d in the module)."""
    params = {'lateral_w': [], 'lateral_b': [], 'pconv_w': [], 'pconv_b': [],
              'down_w': [], 'down_b': []}
    k = key
    for cin in inplanes:
        k, k1, k2, k3, k4 = jax.random.split(k, 5)
        params['lateral_w'].append(0.05 * jax.random.normal(k1, (cin, outplanes), jnp.float32))
        params['lateral_b'].append(0.01 * jax.random.normal(k2, (outplanes,), jnp.float32))
        params['pconv_w'].append(0.05 * jax.random.normal(k3, (3, 3, outplanes, outplanes), jnp.float32))
        params['pconv_b'].append(0.01 * jax.random.normal(k4, (outplanes,), jnp.float32))
    for _ in range(len(inplanes), num_level):
        if downsample == 'conv':
            k, k1, k2 = jax.random.split(k, 3)
            params['down_w'].append(0.05 * jax.random.normal(k1, (3, 3, outplanes, outplanes), jnp.float32))
            params['down_b'].append(0.01 * jax.random.normal(k2, (outplanes,), jnp.float32))
    return params


def _upsample_nearest_xla(x, size):
    Ho, Wo = size
    _, H, W, _ = x.shape
    hi = (jnp.arange(Ho) * H) // Ho
    wi = (jnp.arange(Wo) * W) // Wo
    return x[:, hi][:, :, wi]


def fpn_forward(params, inp, *, inplanes, outplanes, num_level, out_strides,
                downsample='pool', upsample='nearest'):
    """Mirror of FPN.real_forward. inp['features'] are NCHW arrays; outputs are NCHW."""
    assert downsample in ('pool', 'conv')
    assert upsample == 'nearest'  # TODO(synk): bilinear upsample variant not implemented
    features = inp['features']
    nl = len(inplanes)
    assert nl == len(features)

    # Lateral 1x1 convs (NCHW -> NHWC bf16, layout change fused into the matmul).
    laterals = [lateral_conv1x1(f, params['lateral_w'][i], params['lateral_b'][i])
                for i, f in enumerate(features)]

    # Top-down pathway: fused (2x nearest upsample + add + 3x3 conv) kernels.
    outs = [None] * nl
    merged_above = None
    for lvl in range(nl - 1, -1, -1):
        fine = laterals[lvl]
        if lvl == nl - 1:
            conv, _ = pconv3x3(fine, params['pconv_w'][lvl], params['pconv_b'][lvl])
            merged_above = fine                 # top lateral is its own "merged"
        else:
            need_merged = lvl > 0               # lower levels still need the merged lateral
            H, W = fine.shape[1], fine.shape[2]
            Hc, Wc = merged_above.shape[1], merged_above.shape[2]
            if H == 2 * Hc and W == 2 * Wc and W % 8 == 0:
                conv, merged = pconv3x3(fine, params['pconv_w'][lvl], params['pconv_b'][lvl],
                                        coarse=merged_above, return_merged=need_merged)
            else:
                # TODO(synk): non-2x scales fall back to an XLA nearest upsample + add.
                merged_full = fine + _upsample_nearest_xla(merged_above, (H, W))
                conv, _ = pconv3x3(merged_full, params['pconv_w'][lvl], params['pconv_b'][lvl])
                merged = merged_full if need_merged else None
            merged_above = merged
        outs[lvl] = conv                        # NCHW f32, written directly by the kernel

    # Extra pyramid levels (outputs already NCHW; no epilogue transpose needed).
    x_pool = outs[-1]
    x_conv = laterals[-1]
    k = 0
    for lvl in range(num_level):
        if lvl < nl:
            continue
        if downsample == 'pool':
            # MaxPool2d(kernel_size=1, stride=2) == strided subsampling (pure indexing).
            x_pool = x_pool[:, :, ::2, ::2]
            outs.append(x_pool)
        else:
            # TODO(synk): a dedicated stride-2 pconv kernel would avoid the 4x overcompute.
            y, _ = pconv3x3(x_conv, params['down_w'][k], params['down_b'][k])
            y = y[:, :, ::2, ::2]
            outs.append(y)
            x_conv = jnp.transpose(y, (0, 2, 3, 1))
            k += 1

    return {'features': outs, 'strides': out_strides}


# --------------------------- pure-JAX reference (check) ------------------------

def _reference_fpn(params, inp, *, inplanes, outplanes, num_level, out_strides,
                   downsample='pool'):
    feats = [jnp.transpose(f, (0, 2, 3, 1)) for f in inp['features']]
    laterals = [jnp.einsum('nhwc,cd->nhwd', f, params['lateral_w'][i]) + params['lateral_b'][i]
                for i, f in enumerate(feats)]
    nl = len(inplanes)

    def conv3x3_ref(x, w, b, stride=1):
        out = lax.conv_general_dilated(
            x, w, window_strides=(stride, stride), padding=((1, 1), (1, 1)),
            dimension_numbers=('NHWC', 'HWIO', 'NHWC'))
        return out + b

    def upsample_nearest_ref(x, size):
        Ho, Wo = size
        _, H, W, _ = x.shape
        hi = (jnp.arange(Ho) * H) // Ho
        wi = (jnp.arange(Wo) * W) // Wo
        return x[:, hi][:, :, wi]

    outs = []
    for lvl in range(nl)[::-1]:
        if lvl < nl - 1:
            up = upsample_nearest_ref(laterals[lvl + 1], laterals[lvl].shape[1:3])
            laterals[lvl] = laterals[lvl] + up
        outs.append(conv3x3_ref(laterals[lvl], params['pconv_w'][lvl], params['pconv_b'][lvl]))
    outs = outs[::-1]
    x = outs[-1] if downsample == 'pool' else laterals[-1]
    k = 0
    for lvl in range(num_level):
        if lvl >= nl:
            if downsample == 'pool':
                x = x[:, ::2, ::2, :]
            else:
                x = conv3x3_ref(x, params['down_w'][k], params['down_b'][k], stride=2)
                k += 1
            outs.append(x)
    outs = [jnp.transpose(o, (0, 3, 1, 2)) for o in outs]
    return {'features': outs, 'strides': out_strides}


# ----------------------------------- main --------------------------------------

if __name__ == "__main__":
    # FPN config (small, synthetic): 3 backbone levels + 1 extra pooled level.
    inplanes = [8, 16, 32]
    outplanes = 16
    start_level = 2          # only affects module naming in the torch code
    num_level = 4
    out_strides = [8, 16, 32, 64]
    downsample = 'pool'
    upsample = 'nearest'

    key = jax.random.PRNGKey(0)
    kp, kf0, kf1, kf2 = jax.random.split(key, 4)

    params = init_fpn_params(kp, inplanes, outplanes, num_level, downsample)

    # Input pyramid features, NCHW (like the PyTorch module expects).
    features = [
        jax.random.normal(kf0, (2, 8, 16, 16), jnp.float32),
        jax.random.normal(kf1, (2, 16, 8, 8), jnp.float32),
        jax.random.normal(kf2, (2, 32, 4, 4), jnp.float32),
    ]
    inp = {'features': features, 'strides': [8, 16, 32]}

    out = fpn_forward(params, inp, inplanes=inplanes, outplanes=outplanes,
                      num_level=num_level, out_strides=out_strides,
                      downsample=downsample, upsample=upsample)
    for f in out['features']:
        jax.block_until_ready(f)

    expected_shapes = [(2, 16, 16, 16), (2, 16, 8, 8), (2, 16, 4, 4), (2, 16, 2, 2)]
    assert [tuple(f.shape) for f in out['features']] == expected_shapes
    assert out['strides'] == out_strides

    # Correctness check vs. a pure-JAX (XLA, f32) reference; bf16 MXU operands keep
    # the error well inside the tolerance.
    ref = _reference_fpn(params, inp, inplanes=inplanes, outplanes=outplanes,
                         num_level=num_level, out_strides=out_strides,
                         downsample=downsample)
    for o, r in zip(out['features'], ref['features']):
        err = float(jnp.max(jnp.abs(o.astype(jnp.float32) - r)))
        assert err < 5e-2, f"mismatch vs reference: max abs err {err}"

    print("KERNEL_OK")
</pallas_src>

<mosaic_0001>
module attributes {stable_mosaic.version = 11 : i64} {
  func.func @_lateral_kernel(%arg0: i32, %arg1: i32, %arg2: memref<1x8x256xf32, #tpu.memory_space<vmem>>, %arg3: memref<8x16xbf16, #tpu.memory_space<vmem>>, %arg4: memref<1x16xf32, #tpu.memory_space<vmem>>, %arg5: memref<1x256x16xbf16, #tpu.memory_space<vmem>>) attributes {dimension_semantics = [#tpu.dimension_semantics<parallel>, #tpu.dimension_semantics<parallel>], iteration_bounds = array<i64: 2, 1>, scalar_prefetch = 0 : i64, scratch_operands = 0 : i64, tpu.core_type = #tpu.core_type<tc>, window_params = [{transform_indices = @transform_0, window_bounds = array<i64: 1, 8, 256>}, {pipeline_mode = #tpu.pipeline_mode<synchronous>, transform_indices = @transform_1, window_bounds = array<i64: 8, 16>}, {pipeline_mode = #tpu.pipeline_mode<synchronous>, transform_indices = @transform_2, window_bounds = array<i64: 1, 16>}, {transform_indices = @transform_3, window_bounds = array<i64: 1, 256, 16>}]} {
    %c0 = arith.constant 0 : index
    %c0_0 = arith.constant 0 : index
    %c0_1 = arith.constant 0 : index
    %0 = vector.load %arg2[%c0, %c0_0, %c0_1] : memref<1x8x256xf32, #tpu.memory_space<vmem>>, vector<1x8x256xf32>
    %1 = vector.shape_cast %0 : vector<1x8x256xf32> to vector<8x256xf32>
    %2 = arith.truncf %1 : vector<8x256xf32> to vector<8x256xbf16>
    %c0_2 = arith.constant 0 : index
    %c0_3 = arith.constant 0 : index
    %3 = vector.load %arg3[%c0_2, %c0_3] : memref<8x16xbf16, #tpu.memory_space<vmem>>, vector<8x16xbf16>
    %cst = arith.constant dense<0.000000e+00> : vector<256x16xf32>
    %4 = tpu.matmul %2, %3, %cst {dimension_numbers = #tpu.dot_dimension_numbers<[0], [0], [1], [1], [0, 1, 1, 1], [], []>} : vector<8x256xbf16>, vector<8x16xbf16>, vector<256x16xf32> -> vector<256x16xf32>
    %c0_4 = arith.constant 0 : index
    %c0_5 = arith.constant 0 : index
    %5 = vector.load %arg4[%c0_4, %c0_5] : memref<1x16xf32, #tpu.memory_space<vmem>>, vector<1x16xf32>
    %6 = vector.broadcast %5 : vector<1x16xf32> to vector<256x16xf32>
    %7 = arith.addf %4, %6 : vector<256x16xf32>
    %8 = arith.truncf %7 : vector<256x16xf32> to vector<256x16xbf16>
    %c0_6 = arith.constant 0 : index
    %c0_7 = arith.constant 0 : index
    %c0_8 = arith.constant 0 : index
    %9 = vector.load %arg5[%c0_6, %c0_7, %c0_8] : memref<1x256x16xbf16, #tpu.memory_space<vmem>>, vector<1x256x16xbf16>
    %10 = vector.shape_cast %9 : vector<1x256x16xbf16> to vector<256x16xbf16>
    %11 = vector.shape_cast %8 : vector<256x16xbf16> to vector<1x256x16xbf16>
    tpu.vector_store %arg5[%c0_6, %c0_7, %c0_8], %11 {strides = array<i32>} : memref<1x256x16xbf16, #tpu.memory_space<vmem>>, vector<1x256x16xbf16>,
    return
  }
  func.func @transform_0(%arg0: i32, %arg1: i32) -> (i32, i32, i32) {
    %c0_i32 = arith.constant 0 : i32
    %c0_i32_0 = arith.constant 0 : i32
    return %arg0, %c0_i32, %arg1 : i32, i32, i32
  }
  func.func @transform_1(%arg0: i32, %arg1: i32) -> (i32, i32) {
    %c0_i32 = arith.constant 0 : i32
    %c0_i32_0 = arith.constant 0 : i32
    %c0_i32_1 = arith.constant 0 : i32
    return %c0_i32, %c0_i32_0 : i32, i32
  }
  func.func @transform_2(%arg0: i32, %arg1: i32) -> (i32, i32) {
    %c0_i32 = arith.constant 0 : i32
    %c0_i32_0 = arith.constant 0 : i32
    %c0_i32_1 = arith.constant 0 : i32
    return %c0_i32, %c0_i32_0 : i32, i32
  }
  func.func @transform_3(%arg0: i32, %arg1: i32) -> (i32, i32, i32) {
    %c0_i32 = arith.constant 0 : i32
    %c0_i32_0 = arith.constant 0 : i32
    return %arg0, %arg1, %c0_i32 : i32, i32, i32
  }
}

</mosaic_0001>

<llo_original>
// kernel: tpu_custom_call.1
$region0: #{tpu_custom_call.1}
  #allocation0 [shape = 'u32[]', space=smem, size = 0x4, offset = 0x4, fixed_abs, tag = 'smem constant byte address 0x4 - core index']
  #allocation1 [shape = 'u32[144,128]{1,0:T(1,128)}', space=vmem, size = 0x12000, scoped, tag = 'internal scratch']
  %s0 = inlined_call_operand.hbm [shape: f32[2,8,256], index: 0, kind: input, shape index: {}]
  %s1 = inlined_call_operand.hbm [shape: bf16[8,16], index: 1, kind: input, shape index: {}]
  %s2 = inlined_call_operand.vmem [shape: f32[1,16], index: 2, kind: input, shape index: {}]
  %s3 = inlined_call_operand.vmem [shape: bf16[2,256,16], index: 3, kind: output, shape index: {}]
  %s4 = sld [smem:[#allocation0]]
  $region53: #{tpu_custom_call.1} parent=0
    _
  %s6 = ssub.s32 1, %s4
  %s7 = scalar_select 0, %s6, %s4
  $region1: #{tpu_custom_call.1} parent=0
    #allocation2 [shape = 'u8[16384]{0}', space=vmem, size = 0x4000, scoped, tag = 'input window, operand 0']
    #allocation3 [shape = 's32[2]{0}', space=sflag, size = 0x8, scoped, tag = 'scoped memory for tpu_custom_call.1']
    #allocation4 [shape = 'u8[2048]{0}', space=vmem, size = 0x800, scoped, tag = 'input window, operand 1, single buffered']
    #allocation5 [shape = 's32[1]{0}', space=sflag, size = 0x4, scoped, tag = 'scoped memory for tpu_custom_call.1']
    %8 = vsyncpa [#allocation3], 0
    %s9 = scalar_lea.sflag [#allocation3], 1
    %10 = vsyncpa %s9, 0
    %11 = vsyncpa [#allocation5], 0
    loop: start=0, step=1, limit=4
    $region2: #{tpu_custom_call.1} parent=1 // loop_pre_header
      _
    $region3: #{tpu_custom_call.1} parent=1 // loop_header
      %s13 = sphi 0, %s17
      %p14 = scmp.ge.s32.totalorder %s13, 4
      %s20 = sphi 0, %s32
      %s21 = sphi 0, %s28
      %s22 = sphi 0, %s20
      %s23 = sphi 0, %s21
      %s24 = sphi 0, %s22
      %s25 = sphi 0, %s23
      %s37 = sphi 0, %s39
      %s40 = sphi 0, %s37
      %s41 = sphi 0, %s40
      %s57 = sphi 0, %s41
      %s61 = sphi 0, %s61
      %s63 = sphi 0, %s61
      %s64 = sphi 0, %s63
      %s78 = sphi 0, %s64
      %s82 = sphi 0, %s82
      %s84 = sphi 0, %s82
      %s85 = sphi 0, %s84
      %s99 = sphi 0, %s85
      %s107 = sphi 0, %s109
      %s110 = sphi 0, %s107
      %s111 = sphi 0, %s110
      %s127 = sphi 0, %s111
    $region4: #{tpu_custom_call.1} parent=1 // loop_header_branch
      %16 = sbr.rel (%p14) target = $region8
    $region5: #{tpu_custom_call.1} parent=1 // loop_body
      %s18 = ssub.s32 %s13, 1
      %s19 = ssub.s32 %s13, 2
      %s26 = sadd.s32 1, %s21
      %p27 = scmp.ge.s32.totalorder %s26, 1
      %s28 = scalar_select %p27, 0, %s26
      %s29 = sadd.s32 1, %s20
      %s30 = scalar_select %p27, %s29, %s20
      %p31 = scmp.ge.s32.totalorder %s30, 2
      %s32 = scalar_select %p31, 0, %s30
      %s33 = ssub.s32 %s20, %s32
      %s34 = ssub.s32 %s21, %s28
      %s35 = sor.u32 %s33, %s34
      %p36 = scmp.eq.s32.totalorder %s35, 0
      %s38 = sadd.s32 %s37, 1
      %s39 = scalar_select %p36, %s37, %s38
      %p42 = pneg %p36
      %p43 = scmp.eq.s32.totalorder %s13, 1
      %p44 = por %p42, %p43
      %p45 = scmp.ne.s32.totalorder %s37, %s40
      %p46 = scmp.eq.s32.totalorder %s13, 0
      %p47 = por %p45, %p46
      %p48 = scmp.ne.s32.totalorder %s37, %s40
      %p49 = scmp.eq.s32.totalorder %s18, 1
      %p50 = por %p48, %p49
      %p51 = scmp.ne.s32.totalorder %s40, %s41
      %p52 = scmp.eq.s32.totalorder %s18, 0
      %p53 = por %p51, %p52
      %p54 = scmp.ne.s32.totalorder %s40, %s41
      %p55 = scmp.eq.s32.totalorder %s19, 1
      %p56 = por %p54, %p55
      %p58 = scmp.ne.s32.totalorder %s41, %s57
      %p59 = scmp.eq.s32.totalorder %s19, 0
      %p60 = por %p58, %p59
      %s62 = sadd.s32 %s61, 1
      %p65 = scmp.eq.s32.totalorder %s13, 1
      %p66 = scmp.ne.s32.totalorder %s61, %s63
      %p67 = scmp.eq.s32.totalorder %s13, 0
      %p68 = por %p66, %p67
      %p69 = scmp.ne.s32.totalorder %s61, %s63
      %p70 = scmp.eq.s32.totalorder %s18, 1
      %p71 = por %p69, %p70
      %p72 = scmp.ne.s32.totalorder %s63, %s64
      %p73 = scmp.eq.s32.totalorder %s18, 0
      %p74 = por %p72, %p73
      %p75 = scmp.ne.s32.totalorder %s63, %s64
      %p76 = scmp.eq.s32.totalorder %s19, 1
      %p77 = por %p75, %p76
      %p79 = scmp.ne.s32.totalorder %s64, %s78
      %p80 = scmp.eq.s32.totalorder %s19, 0
      %p81 = por %p79, %p80
      %s83 = sadd.s32 %s82, 1
      %p86 = scmp.eq.s32.totalorder %s13, 1
      %p87 = scmp.ne.s32.totalorder %s82, %s84
      %p88 = scmp.eq.s32.totalorder %s13, 0
      %p89 = por %p87, %p88
      %p90 = scmp.ne.s32.totalorder %s82, %s84
      %p91 = scmp.eq.s32.totalorder %s18, 1
      %p92 = por %p90, %p91
      %p93 = scmp.ne.s32.totalorder %s84, %s85
      %p94 = scmp.eq.s32.totalorder %s18, 0
      %p95 = por %p93, %p94
      %p96 = scmp.ne.s32.totalorder %s84, %s85
      %p97 = scmp.eq.s32.totalorder %s19, 1
      %p98 = por %p96, %p97
      %p100 = scmp.ne.s32.totalorder %s85, %s99
      %p101 = scmp.eq.s32.totalorder %s19, 0
      %p102 = por %p100, %p101
      %s103 = ssub.s32 %s20, %s32
      %s104 = ssub.s32 %s21, %s28
      %s105 = sor.u32 %s103, %s104
      %p106 = scmp.eq.s32.totalorder %s105, 0
      %s108 = sadd.s32 %s107, 1
      %s109 = scalar_select %p106, %s107, %s108
      %p112 = pneg %p106
      %p113 = scmp.eq.s32.totalorder %s13, 1
      %p114 = por %p112, %p113
      %p115 = scmp.ne.s32.totalorder %s107, %s110
      %p116 = scmp.eq.s32.totalorder %s13, 0
      %p117 = por %p115, %p116
      %p118 = scmp.ne.s32.totalorder %s107, %s110
      %p119 = scmp.eq.s32.totalorder %s18, 1
      %p120 = por %p118, %p119
      %p121 = scmp.ne.s32.totalorder %s110, %s111
      %p122 = scmp.eq.s32.totalorder %s18, 0
      %p123 = por %p121, %p122
      %p124 = scmp.ne.s32.totalorder %s110, %s111
      %p125 = scmp.eq.s32.totalorder %s19, 1
      %p126 = por %p124, %p125
      %p128 = scmp.ne.s32.totalorder %s111, %s127
      %p129 = scmp.eq.s32.totalorder %s19, 0
      %p130 = por %p128, %p129
      %p131 = scmp.le.s32.totalorder 1, %s13
      %p132 = scmp.lt.s32.totalorder %s13, 3
      %p133 = pnand %p131, %p132
      %p134 = pneg %p133
      // Predicated region
      $region9: #{tpu_custom_call.1} parent=5 // pred_check
        _
      $region10: #{tpu_custom_call.1} parent=5 // pred_check_branch
        %136 = sbr.rel (%p133) target = $region12
      $region11: #{tpu_custom_call.1} parent=5 // pred_region
        %s137 = ssub.s32 %s13, 1
        // Predicated region
        $region13: #{tpu_custom_call.1} parent=11 // pred_check
          %p138 = pneg %p74
        $region14: #{tpu_custom_call.1} parent=11 // pred_check_branch
          %140 = sbr.rel (%p138) target = $region16
        $region15: #{tpu_custom_call.1} parent=11 // pred_region
          %s142 = ssub.s32 64, 64
          %143 = vsyncadd [#allocation5], %s142
          %s145 = sshll.u32 [#allocation4], 4
          %s146 = int_to_ptr.vmem [resolvable:$true] %s145
          %148 = dma.hbm_to_vmem [thread:$0]  %s1, 64, %s146, [#allocation5]
        $region16: #{tpu_custom_call.1} parent=11 // pred_fallthru
          _
        // Predicated region
        $region17: #{tpu_custom_call.1} parent=11 // pred_check
          %p149 = pneg %p95
        $region18: #{tpu_custom_call.1} parent=11 // pred_check_branch
          %151 = sbr.rel (%p149) target = $region20
        $region19: #{tpu_custom_call.1} parent=11 // pred_region
          _
        $region20: #{tpu_custom_call.1} parent=11 // pred_fallthru
          _
      $region12: #{tpu_custom_call.1} parent=5 // pred_fallthru
        _
      %p152 = scmp.lt.s32.totalorder %s13, 2
      // Predicated region
      $region21: #{tpu_custom_call.1} parent=5 // pred_check
        %p153 = pneg %p152
      $region22: #{tpu_custom_call.1} parent=5 // pred_check_branch
        %155 = sbr.rel (%p153) target = $region24
      $region23: #{tpu_custom_call.1} parent=5 // pred_region
        // Predicated region
        $region25: #{tpu_custom_call.1} parent=23 // pred_check
          %p156 = pneg %p47
        $region26: #{tpu_custom_call.1} parent=23 // pred_check_branch
          %158 = sbr.rel (%p156) target = $region28
        $region27: #{tpu_custom_call.1} parent=23 // pred_region
          %s159 = sand.u32 %s37, 1
          %s160 = scalar_lea.sflag [#allocation3], %s159
          %s161 = sand.u32 %s37, 1
          %s162 = smul.addr %s161, 16
          %s163 = scalar_lea.vmem [#allocation2], %s162
          %s164 = smul.u32 2, %s21
          %s166 = ssub.s32 256, 256
          %167 = vsyncadd %s160, %s166
          %s168 = smul.addr %s20, 2
          %s169 = sadd.s32 %s164, %s168
          %s170 = smul.addr %s169, 128
          %s171 = scalar_lea.hbm %s0, %s170
          %s173 = sshll.u32 %s163, 4
          %s174 = int_to_ptr.vmem [resolvable:$true] %s173
          %176 = dma.hbm_to_vmem [thread:$0]  %s171, 256, %s174, %s160
        $region28: #{tpu_custom_call.1} parent=23 // pred_fallthru
          _
      $region24: #{tpu_custom_call.1} parent=5 // pred_fallthru
        _
      %p177 = scmp.le.s32.totalorder 1, %s13
      %p178 = scmp.lt.s32.totalorder %s13, 3
      %p179 = pnand %p177, %p178
      %p180 = pneg %p179
      // Predicated region
      $region29: #{tpu_custom_call.1} parent=5 // pred_check
        _
      $region30: #{tpu_custom_call.1} parent=5 // pred_check_branch
        %182 = sbr.rel (%p179) target = $region32
      $region31: #{tpu_custom_call.1} parent=5 // pred_region
        %s183 = ssub.s32 %s13, 1
        %s184 = sand.u32 %s40, 1
        %s185 = scalar_lea.sflag [#allocation3], %s184
        %s186 = sand.u32 %s40, 1
        %s187 = smul.addr %s186, 16
        %s188 = scalar_lea.vmem [#allocation2], %s187
        // Predicated region
        $region33: #{tpu_custom_call.1} parent=31 // pred_check
          %p189 = pneg %p53
        $region34: #{tpu_custom_call.1} parent=31 // pred_check_branch
          %191 = sbr.rel (%p189) target = $region36
        $region35: #{tpu_custom_call.1} parent=31 // pred_region
          %192 = dma.done %s185, 256
        $region36: #{tpu_custom_call.1} parent=31 // pred_fallthru
          _
        // Predicated region
        $region37: #{tpu_custom_call.1} parent=31 // pred_check
          %p193 = pneg %p74
        $region38: #{tpu_custom_call.1} parent=31 // pred_check_branch
          %195 = sbr.rel (%p193) target = $region40
        $region39: #{tpu_custom_call.1} parent=31 // pred_region
          %196 = dma.done [#allocation5], 64
        $region40: #{tpu_custom_call.1} parent=31 // pred_fallthru
          _
        %s197 = sand.u32 %s40, 1
        %s198 = scalar_lea.sflag [#allocation3], %s197
        %s199 = sand.u32 %s40, 1
        %s200 = smul.addr %s199, 16
        %s201 = scalar_lea.vmem [#allocation2], %s200
        %p202 = pneg %p53
        %p203 = pneg %p50
        %p204 = pneg %p74
        %p205 = pneg %p71
        %p206 = pneg %p95
        %p207 = pneg %p92
        %p208 = pneg %p123
        %p209 = pneg %p120
        %s210 = smul.u32 32, %s23
        %p211 = scmp.lt.s32.totalorder %s22, 1
        %s212 = scalar_select %p211, %s22, 1
        %p213 = scmp.lt.s32.totalorder %s210, 31
        %s214 = scalar_select %p213, %s210, 31
        %s215 = smul.addr %s212, 32
        %s216 = sadd.s32 %s214, %s215
        %s217 = smul.addr %s216, 4
        %s218 = scalar_lea.vmem %s3, %s217
        %s219 = smul.u32 2, %s23
        %s220 = smul.u32 32, %s23
        %p221 = scmp.lt.s32.totalorder %s22, 1
        %s222 = scalar_select %p221, %s22, 1
        %p223 = scmp.lt.s32.totalorder %s220, 31
        %s224 = scalar_select %p223, %s220, 31
        %s225 = smul.addr %s222, 32
        %s226 = sadd.s32 %s224, %s225
        %s227 = smul.addr %s226, 4
        %s228 = scalar_lea.vmem %s3, %s227
        %s229 = smul.u32 32, %s23
        %v231 = vld [vmem:[%s188] sm:$0xff]
        %v232 = vld [vmem:[%s188 + $0x8] sm:$0xff]
        %v233 = vpack.c.bf16 %v231, %v231
        %v234 = vpack.c.bf16 %v232, %v232
        %v235 = vld [vmem:[#allocation4] sm:$0xf]
        %v236 = vld [vmem:[%s2] sm:$0x1]
        %v238 = vlaneseq
        %v239 = vshrl.u32 %v238, 7
        %v240 = vsub.s32 0, %v239
        %v241 = vrot.slane %v236, %v240
        %243 = vxpose.xlu0.c.b16.start [1/8] %v233, 128
        %244 = vxpose.xlu0.c.b16.cont [2/8] 0, 128
        %245 = vxpose.xlu0.c.b16.cont [3/8] 0, 128
        %246 = vxpose.xlu0.c.b16.cont [4/8] 0, 128
        %247 = vxpose.xlu0.c.b16.cont [5/8] 0, 128
        %248 = vxpose.xlu0.c.b16.cont [6/8] 0, 128
        %249 = vxpose.xlu0.c.b16.cont [7/8] 0, 128
        %250 = vxpose.xlu0.c.b16.end [8/8] 0, 128
        %v251 = vpop.trf.xlu0
        %v252 = vpop.trf.xlu0
        %v253 = vpop.trf.xlu0
        %v254 = vpop.trf.xlu0
        %v255 = vpop.trf.xlu0
        %v256 = vpop.trf.xlu0
        %v257 = vpop.trf.xlu0
        %v258 = vpop.trf.xlu0
        %259 = vxpose.xlu0.c.b16.start [1/8] %v234, 128
        %260 = vxpose.xlu0.c.b16.cont [2/8] 0, 128
        %261 = vxpose.xlu0.c.b16.cont [3/8] 0, 128
        %262 = vxpose.xlu0.c.b16.cont [4/8] 0, 128
        %263 = vxpose.xlu0.c.b16.cont [5/8] 0, 128
        %264 = vxpose.xlu0.c.b16.cont [6/8] 0, 128
        %265 = vxpose.xlu0.c.b16.cont [7/8] 0, 128
        %266 = vxpose.xlu0.c.b16.end [8/8] 0, 128
        %v267 = vpop.trf.xlu0
        %v268 = vpop.trf.xlu0
        %v269 = vpop.trf.xlu0
        %v270 = vpop.trf.xlu0
        %v271 = vpop.trf.xlu0
        %v272 = vpop.trf.xlu0
        %v273 = vpop.trf.xlu0
        %v274 = vpop.trf.xlu0
        %vm275 = vcmask 64512
        %v277 = vsel %vm275, %v251, 0
        %v280 = vsel %vm275, %v252, 0
        %v283 = vsel %vm275, %v253, 0
        %v286 = vsel %vm275, %v254, 0
        %v289 = vsel %vm275, %v255, 0
        %v292 = vsel %vm275, %v256, 0
        %v295 = vsel %vm275, %v257, 0
        %v298 = vsel %vm275, %v258, 0
        %v301 = vsel %vm275, %v267, 0
        %v304 = vsel %vm275, %v268, 0
        %v307 = vsel %vm275, %v269, 0
        %v310 = vsel %vm275, %v270, 0
        %v313 = vsel %vm275, %v271, 0
        %v316 = vsel %vm275, %v272, 0
        %v319 = vsel %vm275, %v273, 0
        %v322 = vsel %vm275, %v274, 0
        %vm324 = vcmask 1043456
        %v326 = vsel %vm324, %v235, 0
        %328 = vmatprep.subr.bf16.mxu0 0
        %329 = vmatpush1.bf16.msra.mxu0 0
        %330 = vmatprep.subr.bf16.mxu0 0
        %331 = vmatpush1.bf16.msra.mxu0 0
        %332 = vmatprep.subr.bf16.mxu0 0
        %333 = vmatpush1.bf16.msra.mxu0 0
        %334 = vmatprep.subr.bf16.mxu0 0
        %335 = vmatpush1.bf16.msra.mxu0 0
        %336 = vmatprep.subr.bf16.mxu0 0
        %337 = vmatpush1.bf16.msra.mxu0 0
        %338 = vmatprep.subr.bf16.mxu0 0
        %339 = vmatpush1.bf16.msra.mxu0 0
        %340 = vmatprep.subr.bf16.mxu0 0
        %341 = vmatpush1.bf16.msra.mxu0 0
        %342 = vmatprep.subr.bf16.mxu0 0
        %343 = vmatpush1.bf16.msra.mxu0 %v326
        %344 = vmatprep.subr.bf16.mxu0 0
        %345 = vmatpush2.bf16.msra.mxu0 0
        %346 = vmatprep.subr.bf16.mxu0 0
        %347 = vmatpush2.bf16.msra.mxu0 0
        %348 = vmatprep.subr.bf16.mxu0 0
        %349 = vmatpush2.bf16.msra.mxu0 0
        %350 = vmatprep.subr.bf16.mxu0 0
        %351 = vmatpush2.bf16.msra.mxu0 0
        %352 = vmatprep.subr.bf16.mxu0 0
        %353 = vmatpush2.bf16.msra.mxu0 0
        %354 = vmatprep.subr.bf16.mxu0 0
        %355 = vmatpush2.bf16.msra.mxu0 0
        %356 = vmatprep.subr.bf16.mxu0 0
        %357 = vmatpush2.bf16.msra.mxu0 0
        %358 = vmatprep.subr.bf16.mxu0 0
        %359 = vmatpush2.bf16.msra.mxu0 0
        %360 = vmatprep.mubr.bf16.mxu0 0
        %361 = vmatmul.mubr.bf16.gmra.mxu0 %v277
        %v362 = vpop.f32.mrf.mxu0
        %v363 = vadd.f32 %v241, %v362
        %v364 = vpop.f32.mrf.mxu0
        %v365 = vpop.f32.mrf.mxu0
        %v366 = vadd.f32 %v241, %v365
        %v367 = vpop.f32.mrf.mxu0
        %368 = vmatprep.mubr.bf16.mxu0 0
        %369 = vmatmul.mubr.bf16.gmra.mxu0 %v280
        %v370 = vpop.f32.mrf.mxu0
        %v371 = vadd.f32 %v241, %v370
        %v372 = vpop.f32.mrf.mxu0
        %v373 = vpop.f32.mrf.mxu0
        %v374 = vadd.f32 %v241, %v373
        %v375 = vpop.f32.mrf.mxu0
        %376 = vmatprep.mubr.bf16.mxu0 0
        %377 = vmatmul.mubr.bf16.gmra.mxu0 %v283
        %v378 = vpop.f32.mrf.mxu0
        %v379 = vadd.f32 %v241, %v378
        %v380 = vpop.f32.mrf.mxu0
        %v381 = vpop.f32.mrf.mxu0
        %v382 = vadd.f32 %v241, %v381
        %v383 = vpop.f32.mrf.mxu0
        %384 = vmatprep.mubr.bf16.mxu0 0
        %385 = vmatmul.mubr.bf16.gmra.mxu0 %v286
        %v386 = vpop.f32.mrf.mxu0
        %v387 = vadd.f32 %v241, %v386
        %v388 = vpop.f32.mrf.mxu0
        %v389 = vpop.f32.mrf.mxu0
        %v390 = vadd.f32 %v241, %v389
        %v391 = vpop.f32.mrf.mxu0
        %392 = vmatprep.mubr.bf16.mxu0 0
        %393 = vmatmul.mubr.bf16.gmra.mxu0 %v289
        %v394 = vpop.f32.mrf.mxu0
        %v395 = vadd.f32 %v241, %v394
        %v396 = vpop.f32.mrf.mxu0
        %v397 = vpop.f32.mrf.mxu0
        %v398 = vadd.f32 %v241, %v397
        %v399 = vpop.f32.mrf.mxu0
        %400 = vmatprep.mubr.bf16.mxu0 0
        %401 = vmatmul.mubr.bf16.gmra.mxu0 %v292
        %v402 = vpop.f32.mrf.mxu0
        %v403 = vadd.f32 %v241, %v402
        %v404 = vpop.f32.mrf.mxu0
        %v405 = vpop.f32.mrf.mxu0
        %v406 = vadd.f32 %v241, %v405
        %v407 = vpop.f32.mrf.mxu0
        %408 = vmatprep.mubr.bf16.mxu0 0
        %409 = vmatmul.mubr.bf16.gmra.mxu0 %v295
        %v410 = vpop.f32.mrf.mxu0
        %v411 = vadd.f32 %v241, %v410
        %v412 = vpop.f32.mrf.mxu0
        %v413 = vpop.f32.mrf.mxu0
        %v414 = vadd.f32 %v241, %v413
        %v415 = vpop.f32.mrf.mxu0
        %416 = vmatprep.mubr.bf16.mxu0 0
        %417 = vmatmul.mubr.bf16.gmra.mxu0 %v298
        %v418 = vpop.f32.mrf.mxu0
        %v419 = vadd.f32 %v241, %v418
        %v420 = vpop.f32.mrf.mxu0
        %v421 = vpop.f32.mrf.mxu0
        %v422 = vadd.f32 %v241, %v421
        %v423 = vpop.f32.mrf.mxu0
        %424 = vmatprep.mubr.bf16.mxu0 0
        %425 = vmatmul.mubr.bf16.gmra.mxu0 %v301
        %v426 = vpop.f32.mrf.mxu0
        %v427 = vadd.f32 %v241, %v426
        %v428 = vpop.f32.mrf.mxu0
        %v429 = vpop.f32.mrf.mxu0
        %v430 = vadd.f32 %v241, %v429
        %v431 = vpop.f32.mrf.mxu0
        %432 = vmatprep.mubr.bf16.mxu0 0
        %433 = vmatmul.mubr.bf16.gmra.mxu0 %v304
        %v434 = vpop.f32.mrf.mxu0
        %v435 = vadd.f32 %v241, %v434
        %v436 = vpop.f32.mrf.mxu0
        %v437 = vpop.f32.mrf.mxu0
        %v438 = vadd.f32 %v241, %v437
        %v439 = vpop.f32.mrf.mxu0
        %440 = vmatprep.mubr.bf16.mxu0 0
        %441 = vmatmul.mubr.bf16.gmra.mxu0 %v307
        %v442 = vpop.f32.mrf.mxu0
        %v443 = vadd.f32 %v241, %v442
        %v444 = vpop.f32.mrf.mxu0
        %v445 = vpop.f32.mrf.mxu0
        %v446 = vadd.f32 %v241, %v445
        %v447 = vpop.f32.mrf.mxu0
        %448 = vmatprep.mubr.bf16.mxu0 0
        %449 = vmatmul.mubr.bf16.gmra.mxu0 %v310
        %v450 = vpop.f32.mrf.mxu0
        %v451 = vadd.f32 %v241, %v450
        %v452 = vpop.f32.mrf.mxu0
        %v453 = vpop.f32.mrf.mxu0
        %v454 = vadd.f32 %v241, %v453
        %v455 = vpop.f32.mrf.mxu0
        %456 = vmatprep.mubr.bf16.mxu0 0
        %457 = vmatmul.mubr.bf16.gmra.mxu0 %v313
        %v458 = vpop.f32.mrf.mxu0
        %v459 = vadd.f32 %v241, %v458
        %v460 = vpop.f32.mrf.mxu0
        %v461 = vpop.f32.mrf.mxu0
        %v462 = vadd.f32 %v241, %v461
        %v463 = vpop.f32.mrf.mxu0
        %464 = vmatprep.mubr.bf16.mxu0 0
        %465 = vmatmul.mubr.bf16.gmra.mxu0 %v316
        %v466 = vpop.f32.mrf.mxu0
        %v467 = vadd.f32 %v241, %v466
        %v468 = vpop.f32.mrf.mxu0
        %v469 = vpop.f32.mrf.mxu0
        %v470 = vadd.f32 %v241, %v469
        %v471 = vpop.f32.mrf.mxu0
        %472 = vmatprep.mubr.bf16.mxu0 0
        %473 = vmatmul.mubr.bf16.gmra.mxu0 %v319
        %v474 = vpop.f32.mrf.mxu0
        %v475 = vadd.f32 %v241, %v474
        %v476 = vpop.f32.mrf.mxu0
        %v477 = vpop.f32.mrf.mxu0
        %v478 = vadd.f32 %v241, %v477
        %v479 = vpop.f32.mrf.mxu0
        %480 = vmatprep.mubr.bf16.mxu0 0
        %481 = vmatmul.mubr.bf16.gmra.mxu0 %v322
        %v482 = vpop.f32.mrf.mxu0
        %v483 = vadd.f32 %v241, %v482
        %v484 = vpop.f32.mrf.mxu0
        %v485 = vpop.f32.mrf.mxu0
        %v486 = vadd.f32 %v241, %v485
        %v487 = vpop.f32.mrf.mxu0
        %488 = vdwg.mxu0
        %v489 = vpack.c.bf16 %v366, %v363
        %v490 = vpack.c.bf16 %v374, %v371
        %v491 = vpack.c.bf16 %v382, %v379
        %v492 = vpack.c.bf16 %v390, %v387
        %v493 = vpack.c.bf16 %v398, %v395
        %v494 = vpack.c.bf16 %v406, %v403
        %v495 = vpack.c.bf16 %v414, %v411
        %v496 = vpack.c.bf16 %v422, %v419
        %v497 = vpack.c.bf16 %v430, %v427
        %v498 = vpack.c.bf16 %v438, %v435
        %v499 = vpack.c.bf16 %v446, %v443
        %v500 = vpack.c.bf16 %v454, %v451
        %v501 = vpack.c.bf16 %v462, %v459
        %v502 = vpack.c.bf16 %v470, %v467
        %v503 = vpack.c.bf16 %v478, %v475
        %v504 = vpack.c.bf16 %v486, %v483
        %v521 = vunpack.c.l.b16 %v489
        %v522 = vunpack.c.h.b16 %v489
        %v523 = vunpack.c.l.b16 %v490
        %v524 = vunpack.c.h.b16 %v490
        %v525 = vunpack.c.l.b16 %v491
        %v526 = vunpack.c.h.b16 %v491
        %v527 = vunpack.c.l.b16 %v492
        %v528 = vunpack.c.h.b16 %v492
        %v529 = vunpack.c.l.b16 %v493
        %v530 = vunpack.c.h.b16 %v493
        %v531 = vunpack.c.l.b16 %v494
        %v532 = vunpack.c.h.b16 %v494
        %v533 = vunpack.c.l.b16 %v495
        %v534 = vunpack.c.h.b16 %v495
        %v535 = vunpack.c.l.b16 %v496
        %v536 = vunpack.c.h.b16 %v496
        %v537 = vunpack.c.l.b16 %v497
        %v538 = vunpack.c.h.b16 %v497
        %v539 = vunpack.c.l.b16 %v498
        %v540 = vunpack.c.h.b16 %v498
        %v541 = vunpack.c.l.b16 %v499
        %v542 = vunpack.c.h.b16 %v499
        %v543 = vunpack.c.l.b16 %v500
        %v544 = vunpack.c.h.b16 %v500
        %v545 = vunpack.c.l.b16 %v501
        %v546 = vunpack.c.h.b16 %v501
        %v547 = vunpack.c.l.b16 %v502
        %v548 = vunpack.c.h.b16 %v502
        %v549 = vunpack.c.l.b16 %v503
        %v550 = vunpack.c.h.b16 %v503
        %v551 = vunpack.c.l.b16 %v504
        %v552 = vunpack.c.h.b16 %v504
        %v553 = vpack.c.b16 %v521, %v521
        %v554 = vpack.c.b16 %v522, %v522
        %v555 = vpack.c.b16 %v523, %v523
        %v556 = vpack.c.b16 %v524, %v524
        %v557 = vpack.c.b16 %v525, %v525
        %v558 = vpack.c.b16 %v526, %v526
        %v559 = vpack.c.b16 %v527, %v527
        %v560 = vpack.c.b16 %v528, %v528
        %v561 = vpack.c.b16 %v529, %v529
        %v562 = vpack.c.b16 %v530, %v530
        %v563 = vpack.c.b16 %v531, %v531
        %v564 = vpack.c.b16 %v532, %v532
        %v565 = vpack.c.b16 %v533, %v533
        %v566 = vpack.c.b16 %v534, %v534
        %v567 = vpack.c.b16 %v535, %v535
        %v568 = vpack.c.b16 %v536, %v536
        %v569 = vpack.c.b16 %v537, %v537
        %v570 = vpack.c.b16 %v538, %v538
        %v571 = vpack.c.b16 %v539, %v539
        %v572 = vpack.c.b16 %v540, %v540
        %v573 = vpack.c.b16 %v541, %v541
        %v574 = vpack.c.b16 %v542, %v542
        %v575 = vpack.c.b16 %v543, %v543
        %v576 = vpack.c.b16 %v544, %v544
        %v577 = vpack.c.b16 %v545, %v545
        %v578 = vpack.c.b16 %v546, %v546
        %v579 = vpack.c.b16 %v547, %v547
        %v580 = vpack.c.b16 %v548, %v548
        %v581 = vpack.c.b16 %v549, %v549
        %v582 = vpack.c.b16 %v550, %v550
        %v583 = vpack.c.b16 %v551, %v551
        %v584 = vpack.c.b16 %v552, %v552
        %vm617 = vcmask 125952
        %618 = vst.msk [vmem:[%s228] sm:$0xf] %vm617, %v553
        %619 = vst.msk [vmem:[%s228 + $0x4] sm:$0xf] %vm617, %v554
        %620 = vst.msk [vmem:[%s228 + $0x8] sm:$0xf] %vm617, %v555
        %621 = vst.msk [vmem:[%s228 + $0xc] sm:$0xf] %vm617, %v556
        %622 = vst.msk [vmem:[%s228 + $0x10] sm:$0xf] %vm617, %v557
        %623 = vst.msk [vmem:[%s228 + $0x14] sm:$0xf] %vm617, %v558
        %624 = vst.msk [vmem:[%s228 + $0x18] sm:$0xf] %vm617, %v559
        %625 = vst.msk [vmem:[%s228 + $0x1c] sm:$0xf] %vm617, %v560
        %626 = vst.msk [vmem:[%s228 + $0x20] sm:$0xf] %vm617, %v561
        %627 = vst.msk [vmem:[%s228 + $0x24] sm:$0xf] %vm617, %v562
        %628 = vst.msk [vmem:[%s228 + $0x28] sm:$0xf] %vm617, %v563
        %629 = vst.msk [vmem:[%s228 + $0x2c] sm:$0xf] %vm617, %v564
        %630 = vst.msk [vmem:[%s228 + $0x30] sm:$0xf] %vm617, %v565
        %631 = vst.msk [vmem:[%s228 + $0x34] sm:$0xf] %vm617, %v566
        %632 = vst.msk [vmem:[%s228 + $0x38] sm:$0xf] %vm617, %v567
        %633 = vst.msk [vmem:[%s228 + $0x3c] sm:$0xf] %vm617, %v568
        %634 = vst.msk [vmem:[%s228 + $0x40] sm:$0xf] %vm617, %v569
        %635 = vst.msk [vmem:[%s228 + $0x44] sm:$0xf] %vm617, %v570
        %636 = vst.msk [vmem:[%s228 + $0x48] sm:$0xf] %vm617, %v571
        %637 = vst.msk [vmem:[%s228 + $0x4c] sm:$0xf] %vm617, %v572
        %638 = vst.msk [vmem:[%s228 + $0x50] sm:$0xf] %vm617, %v573
        %639 = vst.msk [vmem:[%s228 + $0x54] sm:$0xf] %vm617, %v574
        %640 = vst.msk [vmem:[%s228 + $0x58] sm:$0xf] %vm617, %v575
        %641 = vst.msk [vmem:[%s228 + $0x5c] sm:$0xf] %vm617, %v576
        %642 = vst.msk [vmem:[%s228 + $0x60] sm:$0xf] %vm617, %v577
        %643 = vst.msk [vmem:[%s228 + $0x64] sm:$0xf] %vm617, %v578
        %644 = vst.msk [vmem:[%s228 + $0x68] sm:$0xf] %vm617, %v579
        %645 = vst.msk [vmem:[%s228 + $0x6c] sm:$0xf] %vm617, %v580
        %646 = vst.msk [vmem:[%s228 + $0x70] sm:$0xf] %vm617, %v581
        %647 = vst.msk [vmem:[%s228 + $0x74] sm:$0xf] %vm617, %v582
        %648 = vst.msk [vmem:[%s228 + $0x78] sm:$0xf] %vm617, %v583
        %649 = vst.msk [vmem:[%s228 + $0x7c] sm:$0xf] %vm617, %v584
        %s650 = smul.u32 32, %s23
        %p651 = scmp.lt.s32.totalorder %s22, 1
        %s652 = scalar_select %p651, %s22, 1
        %p653 = scmp.lt.s32.totalorder %s650, 31
        %s654 = scalar_select %p653, %s650, 31
        %s655 = smul.addr %s652, 32
        %s656 = sadd.s32 %s654, %s655
        %s657 = smul.addr %s656, 4
        %s658 = scalar_lea.vmem %s3, %s657
        // Predicated region
        $region41: #{tpu_custom_call.1} parent=31 // pred_check
          %p659 = pneg %p120
        $region42: #{tpu_custom_call.1} parent=31 // pred_check_branch
          %661 = sbr.rel (%p659) target = $region44
        $region43: #{tpu_custom_call.1} parent=31 // pred_region
          %s662 = smul.u32 32, %s23
        $region44: #{tpu_custom_call.1} parent=31 // pred_fallthru
          _
      $region32: #{tpu_custom_call.1} parent=5 // pred_fallthru
        _
      %p663 = scmp.le.s32.totalorder 2, %s13
      // Predicated region
      $region45: #{tpu_custom_call.1} parent=5 // pred_check
        %p664 = pneg %p663
      $region46: #{tpu_custom_call.1} parent=5 // pred_check_branch
        %666 = sbr.rel (%p664) target = $region48
      $region47: #{tpu_custom_call.1} parent=5 // pred_region
        %s667 = ssub.s32 %s13, 2
        // Predicated region
        $region49: #{tpu_custom_call.1} parent=47 // pred_check
          %p668 = pneg %p126
        $region50: #{tpu_custom_call.1} parent=47 // pred_check_branch
          %670 = sbr.rel (%p668) target = $region52
        $region51: #{tpu_custom_call.1} parent=47 // pred_region
          %s671 = smul.u32 32, %s25
          %p672 = scmp.lt.s32.totalorder %s24, 1
          %s673 = scalar_select %p672, %s24, 1
          %p674 = scmp.lt.s32.totalorder %s671, 31
          %s675 = scalar_select %p674, %s671, 31
          %s676 = smul.addr %s673, 32
          %s677 = sadd.s32 %s675, %s676
          %s678 = smul.addr %s677, 4
          %s679 = scalar_lea.vmem %s3, %s678
        $region52: #{tpu_custom_call.1} parent=47 // pred_fallthru
          _
      $region48: #{tpu_custom_call.1} parent=5 // pred_fallthru
        _
    $region6: #{tpu_custom_call.1} parent=1 // loop_footer
      %s17 = sadd.s32 1, %s13
    $region7: #{tpu_custom_call.1} parent=1 // loop_footer_branch
      %12 = sbr.rel target = $region3
    $region8: #{tpu_custom_call.1} parent=1 // loop_exit
      _
    %680 = vsyncpa [#allocation3], 1
    %s681 = scalar_lea.sflag [#allocation3], 1
    %682 = vsyncpa %s681, 1
    %683 = vsyncpa [#allocation5], 1

</llo_original>
